<compile_context>
chip_gen: v6e
topology: v6e:2x2x1
jax: 0.10.0
libtpu: 0.0.40
codegen_flags: <defaults>
</compile_context>

<pallas_src>
import jax
import jax.numpy as jnp
from jax import lax
from jax.experimental import pallas as pl
from jax.experimental.pallas import tpu as pltpu


# ---------------------------------------------------------------------------
# Tiling heuristics
# ---------------------------------------------------------------------------

_BLOCK_BYTES = 4 * 1024 * 1024   # ~4 MiB per-input pipeline block
_MAX_TILE_ROWS = 8192
_MAX_TILE_COLS = 1024


def _cdiv(a, b):
    return -(-a // b)


def _round_up(x, m):
    return _cdiv(x, m) * m


def _pick_tile_cols(n):
    """Largest multiple-of-128 divisor of n that is <= _MAX_TILE_COLS."""
    if n <= _MAX_TILE_COLS:
        return n
    for d in range(_MAX_TILE_COLS, 0, -128):
        if n % d == 0:
            return d
    return 128  # unreachable when n % 128 == 0


def _choose_tiling(B, N):
    tile_cols = _pick_tile_cols(N)
    # In-kernel compute slice: keep intermediates at vreg scale.
    slice_rows = 32 if tile_cols <= 512 else 8
    cap_rows = max(slice_rows, min(_MAX_TILE_ROWS, _BLOCK_BYTES // (tile_cols * 4)))
    tile_rows = min(cap_rows, B)
    slice_rows = min(slice_rows, tile_rows)
    tile_rows = max(slice_rows, (tile_rows // slice_rows) * slice_rows)

    n_row_tiles = _cdiv(B, tile_rows)
    if n_row_tiles > 1 and n_row_tiles % 2 == 1:
        # Nudge the tile size so the row-tile count is even and the 2-way
        # TensorCore split (v7x megacore) can engage without phantom tiles.
        alt_rows = _round_up(_cdiv(B, n_row_tiles + 1), slice_rows)
        if alt_rows >= slice_rows and _cdiv(B, alt_rows) % 2 == 0:
            tile_rows = alt_rows
            n_row_tiles = _cdiv(B, alt_rows)

    n_splits = 2 if n_row_tiles % 2 == 0 else 1
    tiles_per_split = n_row_tiles // n_splits
    return tile_rows, tile_cols, slice_rows, n_splits, tiles_per_split


# ---------------------------------------------------------------------------
# Kernel
# ---------------------------------------------------------------------------

def _make_kernel(B, tiles_per_split, tile_rows, tile_cols, slice_rows, needs_bounds):
    n_slices = tile_rows // slice_rows
    groups = slice_rows // 8

    def kernel(logits_ref, labels_ref, num_ref, den_ref):
        s = pl.program_id(0)          # TensorCore split (parallel)
        i = pl.program_id(2)          # row-tile (reduction) axis, innermost

        @pl.when(i == 0)
        def _init():
            num_ref[...] = jnp.zeros_like(num_ref)
            den_ref[...] = jnp.zeros_like(den_ref)

        # Global row index of the first row of this block.
        row0 = (s * tiles_per_split + i) * tile_rows

        def process(j):
            if isinstance(j, int):
                r = j * slice_rows
            else:
                r = pl.multiple_of(j * slice_rows, slice_rows)
            logits = logits_ref[pl.ds(r, slice_rows), :]
            labels = labels_ref[pl.ds(r, slice_rows), :]

            not_pad = labels != jnp.float32(-1.0)
            # Single-log select: exact for hard labels {0,1}; padded entries are
            # zeroed by the mask exactly as in the reference.
            arg = jnp.where(labels == jnp.float32(1.0), logits, 1.0 - logits)

            if needs_bounds:
                rows = lax.broadcasted_iota(jnp.int32, (slice_rows, tile_cols), 0)
                in_bounds = (row0 + r + rows) < B
                mask = (in_bounds & not_pad).astype(jnp.float32)
                # Force the log argument to 1.0 for out-of-bounds rows so garbage
                # from the partial last tile can never produce NaN/Inf.
                arg = jnp.where(in_bounds, arg, jnp.float32(1.0))
            else:
                mask = not_pad.astype(jnp.float32)

            losses = -jnp.log(arg)

            if groups > 1:
                # Fold the slice down to (8, tile_cols) with pure VPU adds
                # (reshape only splits the leading sublane dim).
                num_part = jnp.sum((losses * mask).reshape(groups, 8, tile_cols), axis=0)
                den_part = jnp.sum(mask.reshape(groups, 8, tile_cols), axis=0)
            else:
                num_part = losses * mask
                den_part = mask

            num_ref[...] += num_part
            den_ref[...] += den_part

        if n_slices == 1:
            process(0)
        else:
            if n_slices % 4 == 0:
                unroll = 4
            elif n_slices % 2 == 0:
                unroll = 2
            else:
                unroll = 1

            def body(j, carry):
                process(j)
                return carry

            lax.fori_loop(0, n_slices, body, 0, unroll=unroll)

    return kernel


# ---------------------------------------------------------------------------
# Wrapper
# ---------------------------------------------------------------------------

def custom_cross_entropy_loss(logits, labels):
    """Pallas implementation of CustomCrossEntropyLoss.forward.

    logits, labels: float32 arrays of identical shape (B, N); B a multiple of 8,
    N a multiple of 128. labels must be hard targets in {0, 1} with -1 padding
    (the single-log formulation is only exact for hard labels). Returns a scalar
    float32 loss. Like the reference, an all-padded batch yields 0/0.
    """
    B, N = logits.shape
    assert labels.shape == (B, N)
    assert B % 8 == 0 and N % 128 == 0
    assert logits.dtype == jnp.float32 and labels.dtype == jnp.float32
    # TODO(synk): accept int8/bf16 labels straight from the caller (cuts HBM
    # traffic by up to ~40%); casting here would cost a full extra HBM pass.

    tile_rows, tile_cols, slice_rows, n_splits, tiles_per_split = _choose_tiling(B, N)
    n_row_tiles = n_splits * tiles_per_split
    n_col_tiles = N // tile_cols
    needs_bounds = (n_row_tiles * tile_rows != B)

    kernel = _make_kernel(B, tiles_per_split, tile_rows, tile_cols, slice_rows,
                          needs_bounds)

    grid = (n_splits, n_col_tiles, tiles_per_split)

    def in_map(s, c, i):
        return (s * tiles_per_split + i, c)

    def out_map(s, c, i):
        return (s, c)

    part_shape = jax.ShapeDtypeStruct((n_splits * 8, N), jnp.float32)

    num_part, den_part = pl.pallas_call(
        kernel,
        out_shape=(part_shape, part_shape),
        grid_spec=pltpu.PrefetchScalarGridSpec(
            num_scalar_prefetch=0,
            grid=grid,
            in_specs=[
                pl.BlockSpec((tile_rows, tile_cols), in_map),
                pl.BlockSpec((tile_rows, tile_cols), in_map),
            ],
            out_specs=[
                pl.BlockSpec((8, tile_cols), out_map),
                pl.BlockSpec((8, tile_cols), out_map),
            ],
        ),
        compiler_params=pltpu.CompilerParams(
            dimension_semantics=("parallel", "parallel", "arbitrary"),
            vmem_limit_bytes=48 * 1024 * 1024,
        ),
    )(logits, labels)

    # Final tiny cross-lane reduce + divide in plain JAX.
    return jnp.sum(num_part) / jnp.sum(den_part)


def _reference_loss(logits, labels):
    mask = (labels != -1.0).astype(jnp.float32)
    losses = -(labels * jnp.log(logits) + (1.0 - labels) * jnp.log(1.0 - logits))
    return jnp.sum(losses * mask) / jnp.sum(mask)


if __name__ == "__main__":
    key = jax.random.PRNGKey(0)

    def make_case(k, B, N):
        k1, k2, k3 = jax.random.split(k, 3)
        # logits: probabilities strictly inside (0, 1)
        logits = jax.random.uniform(k1, (B, N), jnp.float32, minval=0.05, maxval=0.95)
        # labels: 0/1 targets with some positions padded with -1
        labels = jax.random.bernoulli(k2, 0.5, (B, N)).astype(jnp.float32)
        pad = jax.random.bernoulli(k3, 0.2, (B, N))
        labels = jnp.where(pad, jnp.float32(-1.0), labels)
        return logits, labels

    cases = [(32, 128),    # single tile, no masking
             (200, 128),   # 2-way split + partial (masked) last tile
             (128, 256)]   # multi-slice fori_loop path
    keys = jax.random.split(key, len(cases))
    for k, (B, N) in zip(keys, cases):
        logits, labels = make_case(k, B, N)
        loss = jax.block_until_ready(custom_cross_entropy_loss(logits, labels))
        ref = jax.block_until_ready(_reference_loss(logits, labels))
        assert jnp.allclose(loss, ref, rtol=1e-4, atol=1e-5), (B, N, loss, ref)

    print("KERNEL_OK")
</pallas_src>

<mosaic_0001>
module attributes {stable_mosaic.version = 11 : i64} {
  func.func @kernel(%arg0: i32, %arg1: i32, %arg2: i32, %arg3: memref<32x128xf32, #tpu.memory_space<vmem>>, %arg4: memref<32x128xf32, #tpu.memory_space<vmem>>, %arg5: memref<8x128xf32, #tpu.memory_space<vmem>>, %arg6: memref<8x128xf32, #tpu.memory_space<vmem>>) attributes {dimension_semantics = [#tpu.dimension_semantics<parallel>, #tpu.dimension_semantics<parallel>, #tpu.dimension_semantics<arbitrary>], iteration_bounds = array<i64: 1, 1, 1>, scalar_prefetch = 0 : i64, scratch_operands = 0 : i64, tpu.core_type = #tpu.core_type<tc>, window_params = [{transform_indices = @transform_0, window_bounds = array<i64: 32, 128>}, {transform_indices = @transform_1, window_bounds = array<i64: 32, 128>}, {transform_indices = @transform_2, window_bounds = array<i64: 8, 128>}, {transform_indices = @transform_3, window_bounds = array<i64: 8, 128>}]} {
    %c0_i32 = arith.constant 0 : i32
    %0 = arith.cmpi eq, %arg2, %c0_i32 : i32
    %1 = arith.extui %0 : i1 to i32
    %c0_i32_0 = arith.constant 0 : i32
    %2 = arith.cmpi ne, %1, %c0_i32_0 : i32
    scf.if %2 {
      %cst_17 = arith.constant 0.000000e+00 : f32
      %28 = vector.broadcast %cst_17 : f32 to vector<8x128xf32>
      %c0_18 = arith.constant 0 : index
      %c0_19 = arith.constant 0 : index
      %29 = vector.load %arg5[%c0_18, %c0_19] : memref<8x128xf32, #tpu.memory_space<vmem>>, vector<8x128xf32>
      tpu.vector_store %arg5[%c0_18, %c0_19], %28 {strides = array<i32>} : memref<8x128xf32, #tpu.memory_space<vmem>>, vector<8x128xf32>,
      %cst_20 = arith.constant 0.000000e+00 : f32
      %30 = vector.broadcast %cst_20 : f32 to vector<8x128xf32>
      %c0_21 = arith.constant 0 : index
      %c0_22 = arith.constant 0 : index
      %31 = vector.load %arg6[%c0_21, %c0_22] : memref<8x128xf32, #tpu.memory_space<vmem>>, vector<8x128xf32>
      tpu.vector_store %arg6[%c0_21, %c0_22], %30 {strides = array<i32>} : memref<8x128xf32, #tpu.memory_space<vmem>>, vector<8x128xf32>,
    } else {
    }
    %c0 = arith.constant 0 : index
    %c0_1 = arith.constant 0 : index
    %3 = vector.load %arg3[%c0, %c0_1] : memref<32x128xf32, #tpu.memory_space<vmem>>, vector<32x128xf32>
    %c0_2 = arith.constant 0 : index
    %c0_3 = arith.constant 0 : index
    %4 = vector.load %arg4[%c0_2, %c0_3] : memref<32x128xf32, #tpu.memory_space<vmem>>, vector<32x128xf32>
    %cst = arith.constant -1.000000e+00 : f32
    %5 = vector.broadcast %cst : f32 to vector<32x128xf32>
    %6 = arith.cmpf one, %4, %5 : vector<32x128xf32>
    %cst_4 = arith.constant 1.000000e+00 : f32
    %7 = vector.broadcast %cst_4 : f32 to vector<32x128xf32>
    %8 = arith.cmpf oeq, %4, %7 : vector<32x128xf32>
    %cst_5 = arith.constant 1.000000e+00 : f32
    %9 = vector.broadcast %cst_5 : f32 to vector<32x128xf32>
    %10 = arith.subf %9, %3 : vector<32x128xf32>
    %11 = arith.select %8, %3, %10 : vector<32x128xi1>, vector<32x128xf32>
    %12 = arith.extui %6 : vector<32x128xi1> to vector<32x128xi32>
    %13 = arith.sitofp %12 : vector<32x128xi32> to vector<32x128xf32>
    %14 = math.log %11 : vector<32x128xf32>
    %cst_6 = arith.constant 0.000000e+00 : f32
    %15 = vector.broadcast %cst_6 : f32 to vector<32x128xf32>
    %16 = arith.subf %15, %14 : vector<32x128xf32>
    %17 = arith.mulf %16, %13 : vector<32x128xf32>
    %18 = vector.shape_cast %17 : vector<32x128xf32> to vector<4x8x128xf32>
    %cst_7 = arith.constant dense<0.000000e+00> : vector<8x128xf32>
    %19 = vector.multi_reduction <add>, %18, %cst_7 [0] : vector<4x8x128xf32> to vector<8x128xf32>
    %20 = vector.shape_cast %13 : vector<32x128xf32> to vector<4x8x128xf32>
    %cst_8 = arith.constant dense<0.000000e+00> : vector<8x128xf32>
    %21 = vector.multi_reduction <add>, %20, %cst_8 [0] : vector<4x8x128xf32> to vector<8x128xf32>
    %c0_9 = arith.constant 0 : index
    %c0_10 = arith.constant 0 : index
    %22 = vector.load %arg5[%c0_9, %c0_10] : memref<8x128xf32, #tpu.memory_space<vmem>>, vector<8x128xf32>
    %23 = arith.addf %22, %19 : vector<8x128xf32>
    %c0_11 = arith.constant 0 : index
    %c0_12 = arith.constant 0 : index
    %24 = vector.load %arg5[%c0_11, %c0_12] : memref<8x128xf32, #tpu.memory_space<vmem>>, vector<8x128xf32>
    tpu.vector_store %arg5[%c0_11, %c0_12], %23 {strides = array<i32>} : memref<8x128xf32, #tpu.memory_space<vmem>>, vector<8x128xf32>,
    %c0_13 = arith.constant 0 : index
    %c0_14 = arith.constant 0 : index
    %25 = vector.load %arg6[%c0_13, %c0_14] : memref<8x128xf32, #tpu.memory_space<vmem>>, vector<8x128xf32>
    %26 = arith.addf %25, %21 : vector<8x128xf32>
    %c0_15 = arith.constant 0 : index
    %c0_16 = arith.constant 0 : index
    %27 = vector.load %arg6[%c0_15, %c0_16] : memref<8x128xf32, #tpu.memory_space<vmem>>, vector<8x128xf32>
    tpu.vector_store %arg6[%c0_15, %c0_16], %26 {strides = array<i32>} : memref<8x128xf32, #tpu.memory_space<vmem>>, vector<8x128xf32>,
    return
  }
  func.func @transform_0(%arg0: i32, %arg1: i32, %arg2: i32) -> (i32, i32) {
    %c1_i32 = arith.constant 1 : i32
    %0 = arith.muli %arg0, %c1_i32 : i32
    %1 = arith.addi %0, %arg2 : i32
    %c0_i32 = arith.constant 0 : i32
    return %1, %arg1 : i32, i32
  }
  func.func @transform_1(%arg0: i32, %arg1: i32, %arg2: i32) -> (i32, i32) {
    %c1_i32 = arith.constant 1 : i32
    %0 = arith.muli %arg0, %c1_i32 : i32
    %1 = arith.addi %0, %arg2 : i32
    %c0_i32 = arith.constant 0 : i32
    return %1, %arg1 : i32, i32
  }
  func.func @transform_2(%arg0: i32, %arg1: i32, %arg2: i32) -> (i32, i32) {
    %c0_i32 = arith.constant 0 : i32
    return %arg0, %arg1 : i32, i32
  }
  func.func @transform_3(%arg0: i32, %arg1: i32, %arg2: i32) -> (i32, i32) {
    %c0_i32 = arith.constant 0 : i32
    return %arg0, %arg1 : i32, i32
  }
}

</mosaic_0001>

<llo_original>
// kernel: tpu_custom_call.1
$region0: #{tpu_custom_call.1}
  #allocation0 [shape = 'u32[]', space=smem, size = 0x4, offset = 0x4, fixed_abs, tag = 'smem constant byte address 0x4 - core index']
  #allocation1 [shape = 'u32[144,128]{1,0:T(1,128)}', space=vmem, size = 0x12000, scoped, tag = 'internal scratch']
  %s0 = inlined_call_operand.hbm [shape: f32[32,128], index: 0, kind: input, shape index: {}]
  %s1 = inlined_call_operand.hbm [shape: f32[32,128], index: 1, kind: input, shape index: {}]
  %s2 = inlined_call_operand.hbm [shape: f32[8,128], index: 2, kind: output, shape index: {0}]
  %s3 = inlined_call_operand.hbm [shape: f32[8,128], index: 3, kind: output, shape index: {1}]
  %4 = xla_tuple %s2, %s3
  %s5 = sld [smem:[#allocation0]]
  $region38: #{tpu_custom_call.1} parent=0
    _
  %s7 = ssub.s32 1, %s5
  %s8 = scalar_select 0, %s7, %s5
  $region1: #{tpu_custom_call.1} parent=0
    #allocation2 [shape = 'u8[16384]{0}', space=vmem, size = 0x4000, scoped, tag = 'input window, operand 0, single buffered']
    #allocation3 [shape = 's32[1]{0}', space=sflag, size = 0x4, scoped, tag = 'scoped memory for tpu_custom_call.1']
    #allocation4 [shape = 's32[1]{0}', space=sflag, size = 0x4, scoped, tag = 'scoped memory for tpu_custom_call.1']
    #allocation5 [shape = 'u8[16384]{0}', space=vmem, size = 0x4000, scoped, tag = 'input window, operand 1, single buffered']
    #allocation6 [shape = 's32[1]{0}', space=sflag, size = 0x4, scoped, tag = 'scoped memory for tpu_custom_call.1']
    #allocation7 [shape = 'u8[4096]{0}', space=vmem, size = 0x1000, scoped, tag = 'output window, operand 0, single buffered']
    #allocation8 [shape = 'u8[4096]{0}', space=vmem, size = 0x1000, scoped, tag = 'output window, operand 1, single buffered']
    #allocation9 [shape = 's32[1]{0}', space=sflag, size = 0x4, scoped, tag = 'scoped memory for tpu_custom_call.1']
    %9 = vsyncpa [#allocation3], 0
    %10 = vsyncpa [#allocation6], 0
    %11 = vsyncpa [#allocation4], 0
    %12 = vsyncpa [#allocation9], 0
    // Predicated region
    $region2: #{tpu_custom_call.1} parent=1 // pred_check
      _
    $region3: #{tpu_custom_call.1} parent=1 // pred_check_branch
      %14 = sbr.rel (0) target = $region5
    $region4: #{tpu_custom_call.1} parent=1 // pred_region
      %s15 = sadd.s32 0, 0
      %s16 = smul.u32 4, %s15
      %s18 = ssub.s32 512, 512
      %19 = vsyncadd [#allocation3], %s18
      %s20 = smul.addr %s16, 128
      %s21 = scalar_lea.hbm %s0, %s20
      %s22 = sshll.u32 [#allocation2], 4
      %s23 = int_to_ptr.vmem [resolvable:$true] %s22
      %28 = dma.hbm_to_vmem [thread:$0]  %s21, 512, %s23, [#allocation3], 128, 128, 8
    $region5: #{tpu_custom_call.1} parent=1 // pred_fallthru
      _
    // Predicated region
    $region6: #{tpu_custom_call.1} parent=1 // pred_check
      _
    $region7: #{tpu_custom_call.1} parent=1 // pred_check_branch
      %30 = sbr.rel (0) target = $region9
    $region8: #{tpu_custom_call.1} parent=1 // pred_region
      %s31 = sadd.s32 0, 0
      %s32 = smul.u32 4, %s31
      %s34 = ssub.s32 512, 512
      %35 = vsyncadd [#allocation6], %s34
      %s36 = smul.addr %s32, 128
      %s37 = scalar_lea.hbm %s1, %s36
      %s38 = sshll.u32 [#allocation5], 4
      %s39 = int_to_ptr.vmem [resolvable:$true] %s38
      %44 = dma.hbm_to_vmem [thread:$0]  %s37, 512, %s39, [#allocation6], 128, 128, 8
    $region9: #{tpu_custom_call.1} parent=1 // pred_fallthru
      _
    // Predicated region
    $region10: #{tpu_custom_call.1} parent=1 // pred_check
      _
    $region11: #{tpu_custom_call.1} parent=1 // pred_check_branch
      %46 = sbr.rel (0) target = $region13
    $region12: #{tpu_custom_call.1} parent=1 // pred_region
      %47 = dma.done [#allocation3], 512
    $region13: #{tpu_custom_call.1} parent=1 // pred_fallthru
      _
    // Predicated region
    $region14: #{tpu_custom_call.1} parent=1 // pred_check
      _
    $region15: #{tpu_custom_call.1} parent=1 // pred_check_branch
      %49 = sbr.rel (0) target = $region17
    $region16: #{tpu_custom_call.1} parent=1 // pred_region
      %50 = dma.done [#allocation6], 512
    $region17: #{tpu_custom_call.1} parent=1 // pred_fallthru
      _
    %s51 = sadd.s32 0, 0
    %s52 = smul.u32 4, %s51
    %s53 = sadd.s32 0, 0
    %s54 = smul.u32 4, %s53
    %p55 = scmp.eq.s32.totalorder 0, 0
    // Predicated region
    $region18: #{tpu_custom_call.1} parent=1 // pred_check
      %p56 = pneg %p55
    $region19: #{tpu_custom_call.1} parent=1 // pred_check_branch
      %58 = sbr.rel (%p56) target = $region21
    $region20: #{tpu_custom_call.1} parent=1 // pred_region
      %59 = vst [vmem:[#allocation7] sm:$0xff] 0.0
      %60 = vst [vmem:[#allocation8] sm:$0xff] 0.0
    $region21: #{tpu_custom_call.1} parent=1 // pred_fallthru
      _
    %v61 = vld [vmem:[#allocation2] sm:$0xff]
    %v62 = vld [vmem:[#allocation2 + $0x8] sm:$0xff]
    %v63 = vld [vmem:[#allocation2 + $0x10] sm:$0xff]
    %v64 = vld [vmem:[#allocation2 + $0x18] sm:$0xff]
    %v65 = vld [vmem:[#allocation5] sm:$0xff]
    %v66 = vld [vmem:[#allocation5 + $0x8] sm:$0xff]
    %v67 = vld [vmem:[#allocation5 + $0x10] sm:$0xff]
    %v68 = vld [vmem:[#allocation5 + $0x18] sm:$0xff]
    %vm69 = vcmp.ne.f32.partialorder %v65, -1.0
    %vm70 = vcmp.ne.f32.partialorder %v66, -1.0
    %vm71 = vcmp.ne.f32.partialorder %v67, -1.0
    %vm72 = vcmp.ne.f32.partialorder %v68, -1.0
    %vm73 = vcmp.eq.f32.partialorder %v65, 1.0
    %vm74 = vcmp.eq.f32.partialorder %v66, 1.0
    %vm75 = vcmp.eq.f32.partialorder %v67, 1.0
    %vm76 = vcmp.eq.f32.partialorder %v68, 1.0
    %v77 = vsub.f32 1.0, %v61
    %v78 = vsub.f32 1.0, %v62
    %v79 = vsub.f32 1.0, %v63
    %v80 = vsub.f32 1.0, %v64
    %v81 = vsel %vm73, %v61, %v77
    %v82 = vsel %vm74, %v62, %v78
    %v83 = vsel %vm75, %v63, %v79
    %v84 = vsel %vm76, %v64, %v80
    %v85 = vsel %vm69, 1, 0
    %v86 = vsel %vm70, 1, 0
    %v87 = vsel %vm71, 1, 0
    %v88 = vsel %vm72, 1, 0
    %v89 = vcvt.s32.f32 %v85
    %v90 = vcvt.s32.f32 %v86
    %v91 = vcvt.s32.f32 %v87
    %v92 = vcvt.s32.f32 %v88
    %v93 = vlog2.pop %v81
    %v94 = vmul.f32 %v93, 0.6931472
    %v95 = vlog2.pop %v82
    %v96 = vmul.f32 %v95, 0.6931472
    %v97 = vlog2.pop %v83
    %v98 = vmul.f32 %v97, 0.6931472
    %v99 = vlog2.pop %v84
    %v100 = vmul.f32 %v99, 0.6931472
    %v101 = vsub.f32 0.0, %v94
    %v102 = vsub.f32 0.0, %v96
    %v103 = vsub.f32 0.0, %v98
    %v104 = vsub.f32 0.0, %v100
    %v105 = vmul.f32 %v101, %v89
    %v106 = vmul.f32 %v102, %v90
    %v107 = vmul.f32 %v103, %v91
    %v108 = vmul.f32 %v104, %v92
    %v109 = vadd.f32 %v105, %v106
    %v110 = vadd.f32 %v109, %v107
    %v111 = vadd.f32 %v110, %v108
    %v112 = vadd.f32 %v89, %v90
    %v113 = vadd.f32 %v112, %v91
    %v114 = vadd.f32 %v113, %v92
    %v115 = vld [vmem:[#allocation7] sm:$0xff]
    %v116 = vadd.f32 %v115, %v111
    %117 = vst [vmem:[#allocation7] sm:$0xff] %v116
    %v118 = vld [vmem:[#allocation8] sm:$0xff]
    %v119 = vadd.f32 %v118, %v114
    %120 = vst [vmem:[#allocation8] sm:$0xff] %v119
    // Predicated region
    $region22: #{tpu_custom_call.1} parent=1 // pred_check
      _
    $region23: #{tpu_custom_call.1} parent=1 // pred_check_branch
      %122 = sbr.rel (0) target = $region25
    $region24: #{tpu_custom_call.1} parent=1 // pred_region
      %s124 = ssub.s32 128, 128
      %125 = vsyncadd [#allocation4], %s124
      %s127 = sshll.u32 [#allocation7], 4
      %s128 = int_to_ptr.vmem [resolvable:$true] %s127
      %130 = dma.vmem_to_hbm [thread:$0]  %s128, 128, %s2, [#allocation4]
    $region25: #{tpu_custom_call.1} parent=1 // pred_fallthru
      _
    // Predicated region
    $region26: #{tpu_custom_call.1} parent=1 // pred_check
      _
    $region27: #{tpu_custom_call.1} parent=1 // pred_check_branch
      %132 = sbr.rel (0) target = $region29
    $region28: #{tpu_custom_call.1} parent=1 // pred_region
      %s134 = ssub.s32 128, 128
      %135 = vsyncadd [#allocation9], %s134
      %s137 = sshll.u32 [#allocation8], 4
      %s138 = int_to_ptr.vmem [resolvable:$true] %s137
      %140 = dma.vmem_to_hbm [thread:$0]  %s138, 128, %s3, [#allocation9]
    $region29: #{tpu_custom_call.1} parent=1 // pred_fallthru
      _
    // Predicated region
    $region30: #{tpu_custom_call.1} parent=1 // pred_check
      _
    $region31: #{tpu_custom_call.1} parent=1 // pred_check_branch
      %142 = sbr.rel (0) target = $region33
    $region32: #{tpu_custom_call.1} parent=1 // pred_region
      %143 = dma.done [#allocation4], 128
    $region33: #{tpu_custom_call.1} parent=1 // pred_fallthru
      _
    // Predicated region
    $region34: #{tpu_custom_call.1} parent=1 // pred_check
      _
    $region35: #{tpu_custom_call.1} parent=1 // pred_check_branch
      %145 = sbr.rel (0) target = $region37
    $region36: #{tpu_custom_call.1} parent=1 // pred_region
      %146 = dma.done [#allocation9], 128
    $region37: #{tpu_custom_call.1} parent=1 // pred_fallthru
      _
    %147 = vsyncpa [#allocation3], 1
    %148 = vsyncpa [#allocation6], 1
    %149 = vsyncpa [#allocation4], 1
    %150 = vsyncpa [#allocation9], 1

</llo_original>
